<compile_context>
chip_gen: v5e
topology: v5e:2x2
jax: 0.10.0
libtpu: 0.0.40
codegen_flags: <defaults>
</compile_context>

<pallas_src>
import jax
import jax.numpy as jnp
import numpy as np
from jax.experimental import pallas as pl
from jax.experimental.pallas import tpu as pltpu

BLANK = 0  # blank token index, matches GreedyCTCDecoder(blank=0)


def ctc_greedy_kernel(em_ref, out_ref):
    """em_ref: (T, L) f32 logits for one utterance.
    out_ref: (1, T) i32 lane-dense packed result:
             out[0, t] = argmax label index if frame t is kept, else -1.
    """
    x = em_ref[...]                                    # (T, L) f32
    T, L = x.shape

    # Transposed layout: labels on sublanes, time on lanes -> all results are
    # naturally (1, T) and the final store is lane-dense.
    xt = x.T                                           # (L, T)

    # argmax over labels with first-occurrence tie-break (== torch.argmax).
    max_val = jnp.max(xt, axis=0, keepdims=True)                 # (1, T)
    lbl_ids = jax.lax.broadcasted_iota(jnp.int32, xt.shape, 0)   # (L, T)
    idx = jnp.min(jnp.where(xt == max_val, lbl_ids, jnp.int32(L)),
                  axis=0, keepdims=True)                         # (1, T)
    # Guard pathological rows (all-NaN: nothing equals the max) so the host
    # label lookup can never go out of bounds.
    idx = jnp.minimum(idx, jnp.int32(L - 1))

    # unique_consecutive + blank removal as a keep mask:
    #   keep[t] = (t == 0 or idx[t] != idx[t-1]) and idx[t] != blank
    prev = pltpu.roll(idx, shift=1, axis=1)                      # prev[0,t] = idx[0,t-1]
    t_ids = jax.lax.broadcasted_iota(jnp.int32, idx.shape, 1)    # (1, T)
    is_new = jnp.logical_or(t_ids == 0, idx != prev)             # roll wraps at t=0; guarded
    keep = jnp.logical_and(is_new, idx != jnp.int32(BLANK))

    out_ref[...] = jnp.where(keep, idx, jnp.int32(-1))           # (1, T) i32


def greedy_ctc_indices_batched(emissions: jax.Array) -> jax.Array:
    """emissions: (B, T, L) f32 -> packed (B, 1, T) int32, one pallas_call."""
    B, T, L = emissions.shape
    return pl.pallas_call(
        ctc_greedy_kernel,
        out_shape=jax.ShapeDtypeStruct((B, 1, T), jnp.int32),
        grid=(B,),
        in_specs=[pl.BlockSpec((None, T, L), lambda b: (b, 0, 0))],
        out_specs=pl.BlockSpec((None, 1, T), lambda b: (b, 0, 0)),
        compiler_params=pltpu.CompilerParams(
            dimension_semantics=("parallel",)),  # megacore sharding on v7x
    )(emissions)


def greedy_ctc_indices(emission: jax.Array) -> jax.Array:
    """emission: (T, L) f32 -> packed (1, T) int32.

    Gridless path: whole-array VMEM specs, no pipelining/grid machinery for the
    degenerate single-utterance case.
    """
    T, L = emission.shape
    return pl.pallas_call(
        ctc_greedy_kernel,
        out_shape=jax.ShapeDtypeStruct((1, T), jnp.int32),
        in_specs=[pl.BlockSpec(memory_space=pltpu.MemorySpace.VMEM)],
        out_specs=pl.BlockSpec(memory_space=pltpu.MemorySpace.VMEM),
    )(emission)


# ----------------------- host-side glue (vectorized) ------------------------

def _packed_to_transcript(packed_row: np.ndarray, label_arr: np.ndarray) -> str:
    # TODO(synk): string assembly (variable-length join) has no Pallas
    # equivalent; done host-side with vectorized numpy masking + one join.
    kept = packed_row[packed_row >= 0]
    return "".join(label_arr[kept].tolist())


def greedy_ctc_decode_batch(emissions: jax.Array, labels: str) -> list:
    packed = greedy_ctc_indices_batched(emissions)
    packed_np = np.asarray(jax.device_get(packed))[:, 0, :]    # (B, T)
    label_arr = np.asarray(list(labels))
    return [_packed_to_transcript(row, label_arr) for row in packed_np]


def greedy_ctc_decode(emission: jax.Array, labels: str) -> str:
    packed = greedy_ctc_indices(emission)
    packed_np = np.asarray(jax.device_get(packed))[0]          # (T,)
    return _packed_to_transcript(packed_np, np.asarray(list(labels)))


# ------------------------------- reference ----------------------------------

def greedy_ctc_decode_ref(emission, labels: str) -> str:
    """Pure numpy mirror of the PyTorch GreedyCTCDecoder.forward."""
    indices = np.argmax(np.asarray(emission), axis=-1).tolist()
    collapsed = []
    for i in indices:
        if not collapsed or collapsed[-1] != i:
            collapsed.append(i)
    return "".join(labels[i] for i in collapsed if i != BLANK)


if __name__ == "__main__":
    # 32 labels: blank '-' at index 0 + 26 letters + 5 punctuation/space chars
    labels = "-abcdefghijklmnopqrstuvwxyz '.?,"
    assert len(labels) == 32

    B, T, L = 4, 8, 32  # batch of utterances, num_seq=8, num_label=32
    key = jax.random.PRNGKey(0)
    emissions = jax.random.normal(key, (B, T, L), dtype=jnp.float32)

    # Batched path: one pallas_call over all utterances (grid=(B,), parallel).
    packed = greedy_ctc_indices_batched(emissions)
    jax.block_until_ready(packed)
    label_arr = np.asarray(list(labels))
    packed_np = np.asarray(jax.device_get(packed))[:, 0, :]
    transcripts = [_packed_to_transcript(row, label_arr) for row in packed_np]

    refs = [greedy_ctc_decode_ref(emissions[b], labels) for b in range(B)]
    assert transcripts == refs, (transcripts, refs)

    # Single-utterance path (gridless whole-array VMEM specs).
    single = greedy_ctc_decode(emissions[0], labels)
    jax.block_until_ready(greedy_ctc_indices(emissions[0]))
    assert single == refs[0], (single, refs[0])

    print("KERNEL_OK")
</pallas_src>

<mosaic_0001>
module attributes {stable_mosaic.version = 11 : i64} {
  func.func @ctc_greedy_kernel(%arg0: i32, %arg1: memref<1x8x32xf32, #tpu.memory_space<vmem>>, %arg2: memref<1x1x8xi32, #tpu.memory_space<vmem>>) attributes {dimension_semantics = [#tpu.dimension_semantics<parallel>], iteration_bounds = array<i64: 4>, scalar_prefetch = 0 : i64, scratch_operands = 0 : i64, tpu.core_type = #tpu.core_type<tc>, window_params = [{transform_indices = @transform_0, window_bounds = array<i64: 1, 8, 32>}, {transform_indices = @transform_1, window_bounds = array<i64: 1, 1, 8>}]} {
    %c0 = arith.constant 0 : index
    %c0_0 = arith.constant 0 : index
    %c0_1 = arith.constant 0 : index
    %0 = vector.load %arg1[%c0, %c0_0, %c0_1] : memref<1x8x32xf32, #tpu.memory_space<vmem>>, vector<1x8x32xf32>
    %1 = vector.shape_cast %0 : vector<1x8x32xf32> to vector<8x32xf32>
    %2 = tpu.transpose %1, [1, 0] : vector<8x32xf32> -> vector<32x8xf32>
    %cst = arith.constant dense<0xFF800000> : vector<8xf32>
    %3 = vector.multi_reduction <maximumf>, %2, %cst [0] : vector<32x8xf32> to vector<8xf32>
    %4 = vector.shape_cast %3 : vector<8xf32> to vector<1x8xf32>
    %5 = tpu.iota {dimensions = array<i32: 0>} : vector<32x8xi32>
    %6 = vector.broadcast %4 : vector<1x8xf32> to vector<32x8xf32>
    %7 = arith.cmpf oeq, %2, %6 : vector<32x8xf32>
    %c32_i32 = arith.constant 32 : i32
    %8 = vector.broadcast %c32_i32 : i32 to vector<32x8xi32>
    %9 = arith.select %7, %5, %8 : vector<32x8xi1>, vector<32x8xi32>
    %cst_2 = arith.constant dense<2147483647> : vector<8xi32>
    %10 = vector.multi_reduction <minsi>, %9, %cst_2 [0] : vector<32x8xi32> to vector<8xi32>
    %11 = vector.shape_cast %10 : vector<8xi32> to vector<1x8xi32>
    %c31_i32 = arith.constant 31 : i32
    %12 = vector.broadcast %c31_i32 : i32 to vector<1x8xi32>
    %13 = arith.minsi %11, %12 : vector<1x8xi32>
    %c1_i32 = arith.constant 1 : i32
    %14 = tpu.dynamic_rotate %13 by %c1_i32 dim 1 : vector<1x8xi32>, i32 -> vector<1x8xi32>
    %15 = tpu.iota {dimensions = array<i32: 1>} : vector<1x8xi32>
    %c0_i32 = arith.constant 0 : i32
    %16 = vector.broadcast %c0_i32 : i32 to vector<1x8xi32>
    %17 = arith.cmpi eq, %15, %16 : vector<1x8xi32>
    %18 = arith.cmpi ne, %13, %14 : vector<1x8xi32>
    %19 = arith.ori %17, %18 : vector<1x8xi1>
    %c0_i32_3 = arith.constant 0 : i32
    %20 = vector.broadcast %c0_i32_3 : i32 to vector<1x8xi32>
    %21 = arith.cmpi ne, %13, %20 : vector<1x8xi32>
    %22 = arith.andi %19, %21 : vector<1x8xi1>
    %c-1_i32 = arith.constant -1 : i32
    %23 = vector.broadcast %c-1_i32 : i32 to vector<1x8xi32>
    %24 = arith.select %22, %13, %23 : vector<1x8xi1>, vector<1x8xi32>
    %c0_4 = arith.constant 0 : index
    %c0_5 = arith.constant 0 : index
    %c0_6 = arith.constant 0 : index
    %25 = vector.load %arg2[%c0_4, %c0_5, %c0_6] : memref<1x1x8xi32, #tpu.memory_space<vmem>>, vector<1x1x8xi32>
    %26 = vector.shape_cast %25 : vector<1x1x8xi32> to vector<1x8xi32>
    %27 = vector.shape_cast %24 : vector<1x8xi32> to vector<1x1x8xi32>
    tpu.vector_store %arg2[%c0_4, %c0_5, %c0_6], %27 {strides = array<i32>} : memref<1x1x8xi32, #tpu.memory_space<vmem>>, vector<1x1x8xi32>,
    return
  }
  func.func @transform_0(%arg0: i32) -> (i32, i32, i32) {
    %c0_i32 = arith.constant 0 : i32
    %c0_i32_0 = arith.constant 0 : i32
    %c0_i32_1 = arith.constant 0 : i32
    return %arg0, %c0_i32, %c0_i32_0 : i32, i32, i32
  }
  func.func @transform_1(%arg0: i32) -> (i32, i32, i32) {
    %c0_i32 = arith.constant 0 : i32
    %c0_i32_0 = arith.constant 0 : i32
    %c0_i32_1 = arith.constant 0 : i32
    return %arg0, %c0_i32, %c0_i32_0 : i32, i32, i32
  }
}

</mosaic_0001>

<llo_original>
// kernel: tpu_custom_call.1
$region0: #{tpu_custom_call.1}
  #allocation0 [shape = 'u32[]', space=smem, size = 0x4, offset = 0x4, fixed_abs, tag = 'smem constant byte address 0x4 - core index']
  #allocation1 [shape = 'u32[72,128]{1,0:T(1,128)}', space=vmem, size = 0x9000, scoped, tag = 'internal scratch']
  %s0 = inlined_call_operand.hbm [shape: f32[4,8,32], index: 0, kind: input, shape index: {}]
  %s1 = inlined_call_operand.hbm [shape: s32[4,1,8], index: 1, kind: output, shape index: {}]
  %s2 = sld [smem:[#allocation0]]
  $region41: #{tpu_custom_call.1} parent=0
    _
  %s4 = ssub.s32 1, %s2
  %s5 = scalar_select 0, %s4, %s2
  $region1: #{tpu_custom_call.1} parent=0
    #allocation2 [shape = 'u8[8192]{0}', space=vmem, size = 0x2000, scoped, tag = 'input window, operand 0']
    #allocation3 [shape = 's32[2]{0}', space=sflag, size = 0x8, scoped, tag = 'scoped memory for tpu_custom_call.1']
    #allocation4 [shape = 's32[2]{0}', space=sflag, size = 0x8, scoped, tag = 'scoped memory for tpu_custom_call.1']
    #allocation5 [shape = 'u8[1024]{0}', space=vmem, size = 0x400, scoped, tag = 'output window, operand 0']
    %6 = vsyncpa [#allocation3], 0
    %s7 = scalar_lea.sflag [#allocation3], 1
    %8 = vsyncpa %s7, 0
    %9 = vsyncpa [#allocation4], 0
    %s10 = scalar_lea.sflag [#allocation4], 1
    %11 = vsyncpa %s10, 0
    loop: start=0, step=1, limit=6
    $region2: #{tpu_custom_call.1} parent=1 // loop_pre_header
      _
    $region3: #{tpu_custom_call.1} parent=1 // loop_header
      %s13 = sphi 0, %s17
      %p14 = scmp.ge.s32.totalorder %s13, 6
      %s23 = sphi 0, %s25
      %s26 = sphi 0, %s23
      %s27 = sphi 0, %s26
      %s43 = sphi 0, %s27
      %s49 = sphi 0, %s51
      %s52 = sphi 0, %s49
      %s53 = sphi 0, %s52
      %s69 = sphi 0, %s53
    $region4: #{tpu_custom_call.1} parent=1 // loop_header_branch
      %16 = sbr.rel (%p14) target = $region8
    $region5: #{tpu_custom_call.1} parent=1 // loop_body
      %s18 = ssub.s32 %s13, 1
      %s19 = ssub.s32 %s13, 2
      %s20 = sadd.s32 %s13, 1
      %s21 = ssub.s32 %s13, %s20
      %p22 = scmp.eq.s32.totalorder %s21, 0
      %s24 = sadd.s32 %s23, 1
      %s25 = scalar_select %p22, %s23, %s24
      %p28 = pneg %p22
      %p29 = scmp.eq.s32.totalorder %s13, 3
      %p30 = por %p28, %p29
      %p31 = scmp.ne.s32.totalorder %s23, %s26
      %p32 = scmp.eq.s32.totalorder %s13, 0
      %p33 = por %p31, %p32
      %p34 = scmp.ne.s32.totalorder %s23, %s26
      %p35 = scmp.eq.s32.totalorder %s18, 3
      %p36 = por %p34, %p35
      %p37 = scmp.ne.s32.totalorder %s26, %s27
      %p38 = scmp.eq.s32.totalorder %s18, 0
      %p39 = por %p37, %p38
      %p40 = scmp.ne.s32.totalorder %s26, %s27
      %p41 = scmp.eq.s32.totalorder %s19, 3
      %p42 = por %p40, %p41
      %p44 = scmp.ne.s32.totalorder %s27, %s43
      %p45 = scmp.eq.s32.totalorder %s19, 0
      %p46 = por %p44, %p45
      %s47 = ssub.s32 %s13, %s20
      %p48 = scmp.eq.s32.totalorder %s47, 0
      %s50 = sadd.s32 %s49, 1
      %s51 = scalar_select %p48, %s49, %s50
      %p54 = pneg %p48
      %p55 = scmp.eq.s32.totalorder %s13, 3
      %p56 = por %p54, %p55
      %p57 = scmp.ne.s32.totalorder %s49, %s52
      %p58 = scmp.eq.s32.totalorder %s13, 0
      %p59 = por %p57, %p58
      %p60 = scmp.ne.s32.totalorder %s49, %s52
      %p61 = scmp.eq.s32.totalorder %s18, 3
      %p62 = por %p60, %p61
      %p63 = scmp.ne.s32.totalorder %s52, %s53
      %p64 = scmp.eq.s32.totalorder %s18, 0
      %p65 = por %p63, %p64
      %p66 = scmp.ne.s32.totalorder %s52, %s53
      %p67 = scmp.eq.s32.totalorder %s19, 3
      %p68 = por %p66, %p67
      %p70 = scmp.ne.s32.totalorder %s53, %s69
      %p71 = scmp.eq.s32.totalorder %s19, 0
      %p72 = por %p70, %p71
      %p73 = scmp.le.s32.totalorder 1, %s13
      %p74 = scmp.lt.s32.totalorder %s13, 5
      %p75 = pnand %p73, %p74
      %p76 = pneg %p75
      // Predicated region
      $region9: #{tpu_custom_call.1} parent=5 // pred_check
        _
      $region10: #{tpu_custom_call.1} parent=5 // pred_check_branch
        %78 = sbr.rel (%p75) target = $region12
      $region11: #{tpu_custom_call.1} parent=5 // pred_region
        %s79 = ssub.s32 %s13, 1
      $region12: #{tpu_custom_call.1} parent=5 // pred_fallthru
        _
      %p80 = scmp.lt.s32.totalorder %s13, 4
      // Predicated region
      $region13: #{tpu_custom_call.1} parent=5 // pred_check
        %p81 = pneg %p80
      $region14: #{tpu_custom_call.1} parent=5 // pred_check_branch
        %83 = sbr.rel (%p81) target = $region16
      $region15: #{tpu_custom_call.1} parent=5 // pred_region
        // Predicated region
        $region17: #{tpu_custom_call.1} parent=15 // pred_check
          %p84 = pneg %p33
        $region18: #{tpu_custom_call.1} parent=15 // pred_check_branch
          %86 = sbr.rel (%p84) target = $region20
        $region19: #{tpu_custom_call.1} parent=15 // pred_region
          %s87 = sand.u32 %s23, 1
          %s88 = scalar_lea.sflag [#allocation3], %s87
          %s89 = sand.u32 %s23, 1
          %s90 = smul.addr %s89, 8
          %s91 = scalar_lea.vmem [#allocation2], %s90
          %93 = vsyncadd %s88, 0
          %s94 = smul.addr %s13, 8
          %s95 = scalar_lea.hbm %s0, %s94
          %s97 = sshll.u32 %s95, 4
          %s98 = int_to_ptr.hbm [resolvable:$true] %s97
          %s99 = sshll.u32 %s91, 4
          %s100 = int_to_ptr.vmem [resolvable:$true] %s99
          %102 = dma.hbm_to_vmem [thread:$0]  %s98, 128, %s100, %s88
        $region20: #{tpu_custom_call.1} parent=15 // pred_fallthru
          _
      $region16: #{tpu_custom_call.1} parent=5 // pred_fallthru
        _
      %p103 = scmp.le.s32.totalorder 1, %s13
      %p104 = scmp.lt.s32.totalorder %s13, 5
      %p105 = pnand %p103, %p104
      %p106 = pneg %p105
      // Predicated region
      $region21: #{tpu_custom_call.1} parent=5 // pred_check
        _
      $region22: #{tpu_custom_call.1} parent=5 // pred_check_branch
        %108 = sbr.rel (%p105) target = $region24
      $region23: #{tpu_custom_call.1} parent=5 // pred_region
        %s109 = ssub.s32 %s13, 1
        %s110 = sand.u32 %s26, 1
        %s111 = scalar_lea.sflag [#allocation3], %s110
        %s112 = sand.u32 %s26, 1
        %s113 = smul.addr %s112, 8
        %s114 = scalar_lea.vmem [#allocation2], %s113
        // Predicated region
        $region25: #{tpu_custom_call.1} parent=23 // pred_check
          %p115 = pneg %p39
        $region26: #{tpu_custom_call.1} parent=23 // pred_check_branch
          %117 = sbr.rel (%p115) target = $region28
        $region27: #{tpu_custom_call.1} parent=23 // pred_region
          %119 = dma.done %s111, 128
        $region28: #{tpu_custom_call.1} parent=23 // pred_fallthru
          _
        %s120 = sand.u32 %s26, 1
        %s121 = scalar_lea.sflag [#allocation3], %s120
        %s122 = sand.u32 %s26, 1
        %s123 = smul.addr %s122, 8
        %s124 = scalar_lea.vmem [#allocation2], %s123
        %p125 = pneg %p39
        %p126 = pneg %p36
        %p127 = pneg %p65
        %p128 = pneg %p62
        %s129 = sand.u32 %s52, 1
        %s130 = scalar_lea.sflag [#allocation4], %s129
        %s131 = sand.u32 %s52, 1
        %s132 = scalar_lea.vmem [#allocation5], %s131
        %v133 = vld [vmem:[%s114] sm:$0xff]
        %134 = vxpose.xlu0.b32.start [1/16] %v133, 128
        %135 = vxpose.xlu0.b32.cont [2/16] 0.0, 128
        %136 = vxpose.xlu0.b32.cont [3/16] 0.0, 128
        %137 = vxpose.xlu0.b32.cont [4/16] 0.0, 128
        %138 = vxpose.xlu0.b32.cont [5/16] 0.0, 128
        %139 = vxpose.xlu0.b32.cont [6/16] 0.0, 128
        %140 = vxpose.xlu0.b32.cont [7/16] 0.0, 128
        %141 = vxpose.xlu0.b32.cont [8/16] 0.0, 128
        %142 = vxpose.xlu0.b32.cont [9/16] 0.0, 128
        %143 = vxpose.xlu0.b32.cont [10/16] 0.0, 128
        %144 = vxpose.xlu0.b32.cont [11/16] 0.0, 128
        %145 = vxpose.xlu0.b32.cont [12/16] 0.0, 128
        %146 = vxpose.xlu0.b32.cont [13/16] 0.0, 128
        %147 = vxpose.xlu0.b32.cont [14/16] 0.0, 128
        %148 = vxpose.xlu0.b32.cont [15/16] 0.0, 128
        %149 = vxpose.xlu0.b32.end [16/16] 0.0, 128
        %v150 = vpop.trf.xlu0
        %v151 = vpop.trf.xlu0
        %v152 = vpop.trf.xlu0
        %v153 = vpop.trf.xlu0
        %v154 = vpop.trf.xlu0
        %v155 = vpop.trf.xlu0
        %v156 = vpop.trf.xlu0
        %v157 = vpop.trf.xlu0
        %v158 = vpop.trf.xlu0
        %v159 = vpop.trf.xlu0
        %v160 = vpop.trf.xlu0
        %v161 = vpop.trf.xlu0
        %v162 = vpop.trf.xlu0
        %v163 = vpop.trf.xlu0
        %v164 = vpop.trf.xlu0
        %v165 = vpop.trf.xlu0
        %vm166 = vcmask 64512
        %v167 = vsel %vm166, %v150, -inf
        %v168 = vsel %vm166, %v151, -inf
        %v169 = vsel %vm166, %v152, -inf
        %v170 = vsel %vm166, %v153, -inf
        %v171 = vmax.f32 %v167, %v168
        %v172 = vmax.f32 %v169, %v170
        %v173 = vmax.f32 %v171, %v172
        %v174 = vrot.slane %v173, 4
        %v175 = vmax.f32 %v173, %v174
        %v176 = vrot.slane %v175, 2
        %v177 = vmax.f32 %v175, %v176
        %v178 = vrot.slane %v177, 1
        %v179 = vmax.f32 %v177, %v178
        %v180 = vlaneseq
        %v181 = vshrl.u32 %v180, 7
        %v182 = vadd.s32 %v181, 8
        %v183 = vadd.s32 %v181, 16
        %v184 = vadd.s32 %v181, 24
        %vm185 = vcmp.eq.f32.partialorder %v150, %v179
        %vm186 = vcmp.eq.f32.partialorder %v151, %v179
        %vm187 = vcmp.eq.f32.partialorder %v152, %v179
        %vm188 = vcmp.eq.f32.partialorder %v153, %v179
        %v189 = vsel %vm185, %v181, 32
        %v190 = vsel %vm186, %v182, 32
        %v191 = vsel %vm187, %v183, 32
        %v192 = vsel %vm188, %v184, 32
        %v193 = vsel %vm166, %v189, 2147483647
        %v194 = vsel %vm166, %v190, 2147483647
        %v195 = vsel %vm166, %v191, 2147483647
        %v196 = vsel %vm166, %v192, 2147483647
        %vm197 = vcmp.lt.s32.totalorder %v193, %v194
        %v198 = vsel %vm197, %v193, %v194
        %vm199 = vcmp.lt.s32.totalorder %v195, %v196
        %v200 = vsel %vm199, %v195, %v196
        %vm201 = vcmp.lt.s32.totalorder %v198, %v200
        %v202 = vsel %vm201, %v198, %v200
        %v203 = vrot.slane %v202, 4
        %vm204 = vcmp.lt.s32.totalorder %v202, %v203
        %v205 = vsel %vm204, %v202, %v203
        %v206 = vrot.slane %v205, 2
        %vm207 = vcmp.lt.s32.totalorder %v205, %v206
        %v208 = vsel %vm207, %v205, %v206
        %v209 = vrot.slane %v208, 1
        %vm210 = vcmp.lt.s32.totalorder %v208, %v209
        %v211 = vsel %vm210, %v208, %v209
        %vm212 = vcmp.lt.s32.totalorder %v211, 31
        %v213 = vsel %vm212, %v211, 31
        %vm214 = vcmask 1047616
        %215 = vrot.lane.b32.xlu0 %v213, 8
        %v216 = vpop.permute.xlu0 %215
        %v217 = vsel %vm214, %v216, %v213
        %218 = vrot.lane.b32.xlu0 %v217, 8
        %v219 = vpop.permute.xlu0 %218
        %v220 = vsel %vm214, %v219, %v213
        %v221 = vlaneseq
        %v222 = vand.u32 %v221, 127
        %vm223 = vcmp.eq.s32.totalorder %v222, 0
        %224 = vrot.lane.b32.xlu0 %v220, 121
        %v225 = vpop.permute.xlu0 %224
        %vm226 = vcmp.ne.s32.totalorder %v213, %v225
        %vm227 = vmor %vm223, %vm226
        %vm228 = vcmp.ne.s32.totalorder %v213, 0
        %vm229 = vmand %vm227, %vm228
        %v230 = vsel %vm229, %v213, 4294967295
        %vm231 = vcmask 57344
        %232 = vst.msk [vmem:[%s132] sm:$0x1] %vm231, %v230
        %s233 = sand.u32 %s52, 1
        %s234 = scalar_lea.sflag [#allocation4], %s233
        %s235 = sand.u32 %s52, 1
        %s236 = scalar_lea.vmem [#allocation5], %s235
        // Predicated region
        $region29: #{tpu_custom_call.1} parent=23 // pred_check
          %p237 = pneg %p62
        $region30: #{tpu_custom_call.1} parent=23 // pred_check_branch
          %239 = sbr.rel (%p237) target = $region32
        $region31: #{tpu_custom_call.1} parent=23 // pred_region
          %241 = vsyncadd %s234, 0
          %s242 = scalar_lea.hbm %s1, %s18
          %s244 = sshll.u32 %s236, 4
          %s245 = int_to_ptr.vmem [resolvable:$true] %s244
          %s246 = sshll.u32 %s242, 4
          %s247 = int_to_ptr.hbm [resolvable:$true] %s246
          %249 = dma.vmem_to_hbm [thread:$0]  %s245, 16, %s247, %s234
        $region32: #{tpu_custom_call.1} parent=23 // pred_fallthru
          _
      $region24: #{tpu_custom_call.1} parent=5 // pred_fallthru
        _
      %p250 = scmp.le.s32.totalorder 2, %s13
      // Predicated region
      $region33: #{tpu_custom_call.1} parent=5 // pred_check
        %p251 = pneg %p250
      $region34: #{tpu_custom_call.1} parent=5 // pred_check_branch
        %253 = sbr.rel (%p251) target = $region36
      $region35: #{tpu_custom_call.1} parent=5 // pred_region
        %s254 = ssub.s32 %s13, 2
        // Predicated region
        $region37: #{tpu_custom_call.1} parent=35 // pred_check
          %p255 = pneg %p68
        $region38: #{tpu_custom_call.1} parent=35 // pred_check_branch
          %257 = sbr.rel (%p255) target = $region40
        $region39: #{tpu_custom_call.1} parent=35 // pred_region
          %s258 = sand.u32 %s53, 1
          %s259 = scalar_lea.sflag [#allocation4], %s258
          %s260 = sand.u32 %s53, 1
          %s261 = scalar_lea.vmem [#allocation5], %s260
          %263 = dma.done %s259, 16
        $region40: #{tpu_custom_call.1} parent=35 // pred_fallthru
          _
      $region36: #{tpu_custom_call.1} parent=5 // pred_fallthru
        _
    $region6: #{tpu_custom_call.1} parent=1 // loop_footer
      %s17 = sadd.s32 1, %s13
    $region7: #{tpu_custom_call.1} parent=1 // loop_footer_branch
      %12 = sbr.rel target = $region3
    $region8: #{tpu_custom_call.1} parent=1 // loop_exit
      _
    %264 = vsyncpa [#allocation3], 1
    %s265 = scalar_lea.sflag [#allocation3], 1
    %266 = vsyncpa %s265, 1
    %267 = vsyncpa [#allocation4], 1
    %s268 = scalar_lea.sflag [#allocation4], 1
    %269 = vsyncpa %s268, 1

</llo_original>
